<compile_context>
chip_gen: v7x
topology: tpu7x:2x2x1
jax: 0.10.0
libtpu: 0.0.40
codegen_flags: <defaults>
</compile_context>

<pallas_src>
import jax
import jax.numpy as jnp
from jax.experimental import pallas as pl
from jax.experimental.pallas import tpu as pltpu


def mlp2_kernel(x_ref, w1_ref, b1_ref, w2_ref, b2_ref, o_ref):
    # x_ref: (tm, IN)   w1_ref: (IN, H)   b1_ref: (1, H)
    # w2_ref: (H, OUT)  b2_ref: (1, OUT)  o_ref: (tm, OUT)
    x = x_ref[...]
    # Layer 1: MXU matmul (f32 accumulate) + fused bias-add + ReLU on the VPU.
    h = jnp.dot(x, w1_ref[...], preferred_element_type=jnp.float32)
    h = jnp.maximum(h + b1_ref[...], 0.0)
    # Layer 2: same, then a single store of the (tm, OUT) tile.
    y = jnp.dot(h.astype(w2_ref.dtype), w2_ref[...],
                preferred_element_type=jnp.float32)
    y = jnp.maximum(y + b2_ref[...], 0.0)
    o_ref[...] = y.astype(o_ref.dtype)


def _round_up(x, m):
    return ((x + m - 1) // m) * m


def mlp2_prepare_params(w1, b1, w2, b2):
    """One-time layout plumbing (hoisted out of the per-call path).

    PyTorch nn.Linear stores weights as (OUT, IN); transpose once to (IN, OUT)
    so the kernel feeds the MXU directly (no in-kernel relayout), and lift the
    biases to (1, N) rows so they are 2-D VMEM tiles.
    """
    return w1.T, b1.reshape(1, -1), w2.T, b2.reshape(1, -1)


def _pick_row_tile(batch, tm):
    """Row-tile selection: multiple of 8 (layout-legal), big enough to amortize
    per-grid-step overhead, and capped so large batches give >= 2 grid steps
    (lets the 'parallel' axis use both TensorCores on v7x)."""
    if batch < 16:
        return batch  # single block == full array extent: always layout-legal
    tm = max(8, _round_up(tm, 8))
    half = _round_up((batch + 1) // 2, 8)
    return min(tm, half)


def mlp2_forward(x, w1t, b1r, w2t, b2r, *, tm=512):
    """y = relu(relu(x @ W1^T + b1) @ W2^T + b2).

    Expects params already prepared by `mlp2_prepare_params`
    (w1t: (IN,H), b1r: (1,H), w2t: (H,OUT), b2r: (1,OUT)).
    """
    B, IN = x.shape
    H = w1t.shape[1]
    OUT = w2t.shape[1]

    tm_eff = _pick_row_tile(B, tm)
    grid = (pl.cdiv(B, tm_eff),)

    return pl.pallas_call(
        mlp2_kernel,
        out_shape=jax.ShapeDtypeStruct((B, OUT), x.dtype),
        grid=grid,
        in_specs=[
            pl.BlockSpec((tm_eff, IN), lambda i: (i, 0)),  # x row tile (streamed)
            pl.BlockSpec((IN, H), lambda i: (0, 0)),       # W1^T, VMEM-resident
            pl.BlockSpec((1, H), lambda i: (0, 0)),        # b1
            pl.BlockSpec((H, OUT), lambda i: (0, 0)),      # W2^T, VMEM-resident
            pl.BlockSpec((1, OUT), lambda i: (0, 0)),      # b2
        ],
        out_specs=pl.BlockSpec((tm_eff, OUT), lambda i: (i, 0)),
        compiler_params=pltpu.CompilerParams(
            dimension_semantics=("parallel",),  # batch tiles shard across TCs on v7x
        ),
    )(x, w1t, b1r, w2t, b2r)


if __name__ == "__main__":
    key = jax.random.PRNGKey(0)
    kx, kw1, kb1, kw2, kb2 = jax.random.split(key, 5)

    # Module: Linear(5,5) -> ReLU -> Linear(5,5) -> ReLU; dummy input (3, 5).
    B, IN, H, OUT = 3, 5, 5, 5
    x = jax.random.normal(kx, (B, IN), dtype=jnp.float32)

    # Deterministic params mimicking nn.Linear's uniform(-1/sqrt(fan_in), 1/sqrt(fan_in)).
    bound1 = 1.0 / jnp.sqrt(jnp.float32(IN))
    w1 = jax.random.uniform(kw1, (H, IN), jnp.float32, -bound1, bound1)
    b1 = jax.random.uniform(kb1, (H,), jnp.float32, -bound1, bound1)
    bound2 = 1.0 / jnp.sqrt(jnp.float32(H))
    w2 = jax.random.uniform(kw2, (OUT, H), jnp.float32, -bound2, bound2)
    b2 = jax.random.uniform(kb2, (OUT,), jnp.float32, -bound2, bound2)

    # One-time parameter prep (outside the per-call path).
    w1t, b1r, w2t, b2r = mlp2_prepare_params(w1, b1, w2, b2)

    fwd = jax.jit(mlp2_forward)
    out = fwd(x, w1t, b1r, w2t, b2r)
    out = jax.block_until_ready(out)

    # Reference: plain JAX forward pass of MLP2.
    h_ref = jnp.maximum(x @ w1.T + b1, 0.0)
    ref = jnp.maximum(h_ref @ w2.T + b2, 0.0)
    assert out.shape == (B, OUT), f"bad output shape {out.shape}"
    assert jnp.allclose(out, ref, atol=1e-5, rtol=1e-5), "mismatch vs reference"

    print("KERNEL_OK")
</pallas_src>

<mosaic_0001>
module attributes {stable_mosaic.version = 11 : i64} {
  func.func @mlp2_kernel(%arg0: i32, %arg1: memref<3x5xf32, #tpu.memory_space<vmem>>, %arg2: memref<5x5xf32, #tpu.memory_space<vmem>>, %arg3: memref<1x5xf32, #tpu.memory_space<vmem>>, %arg4: memref<5x5xf32, #tpu.memory_space<vmem>>, %arg5: memref<1x5xf32, #tpu.memory_space<vmem>>, %arg6: memref<3x5xf32, #tpu.memory_space<vmem>>) attributes {dimension_semantics = [#tpu.dimension_semantics<parallel>], iteration_bounds = array<i64: 1>, scalar_prefetch = 0 : i64, scratch_operands = 0 : i64, tpu.core_type = #tpu.core_type<tc>, window_params = [{transform_indices = @transform_0, window_bounds = array<i64: 3, 5>}, {pipeline_mode = #tpu.pipeline_mode<synchronous>, transform_indices = @transform_1, window_bounds = array<i64: 5, 5>}, {pipeline_mode = #tpu.pipeline_mode<synchronous>, transform_indices = @transform_2, window_bounds = array<i64: 1, 5>}, {pipeline_mode = #tpu.pipeline_mode<synchronous>, transform_indices = @transform_3, window_bounds = array<i64: 5, 5>}, {pipeline_mode = #tpu.pipeline_mode<synchronous>, transform_indices = @transform_4, window_bounds = array<i64: 1, 5>}, {transform_indices = @transform_5, window_bounds = array<i64: 3, 5>}]} {
    %c0 = arith.constant 0 : index
    %c0_0 = arith.constant 0 : index
    %0 = vector.load %arg1[%c0, %c0_0] : memref<3x5xf32, #tpu.memory_space<vmem>>, vector<3x5xf32>
    %c0_1 = arith.constant 0 : index
    %c0_2 = arith.constant 0 : index
    %1 = vector.load %arg2[%c0_1, %c0_2] : memref<5x5xf32, #tpu.memory_space<vmem>>, vector<5x5xf32>
    %cst = arith.constant dense<0.000000e+00> : vector<3x5xf32>
    %2 = tpu.matmul %0, %1, %cst {dimension_numbers = #tpu.dot_dimension_numbers<[1], [0], [0], [1], [0, 0, 1, 1], [], []>} : vector<3x5xf32>, vector<5x5xf32>, vector<3x5xf32> -> vector<3x5xf32>
    %c0_3 = arith.constant 0 : index
    %c0_4 = arith.constant 0 : index
    %3 = vector.load %arg3[%c0_3, %c0_4] : memref<1x5xf32, #tpu.memory_space<vmem>>, vector<1x5xf32>
    %4 = vector.broadcast %3 : vector<1x5xf32> to vector<3x5xf32>
    %5 = arith.addf %2, %4 : vector<3x5xf32>
    %cst_5 = arith.constant 0.000000e+00 : f32
    %6 = vector.broadcast %cst_5 : f32 to vector<3x5xf32>
    %7 = arith.maximumf %5, %6 : vector<3x5xf32>
    %c0_6 = arith.constant 0 : index
    %c0_7 = arith.constant 0 : index
    %8 = vector.load %arg4[%c0_6, %c0_7] : memref<5x5xf32, #tpu.memory_space<vmem>>, vector<5x5xf32>
    %cst_8 = arith.constant dense<0.000000e+00> : vector<3x5xf32>
    %9 = tpu.matmul %7, %8, %cst_8 {dimension_numbers = #tpu.dot_dimension_numbers<[1], [0], [0], [1], [0, 0, 1, 1], [], []>} : vector<3x5xf32>, vector<5x5xf32>, vector<3x5xf32> -> vector<3x5xf32>
    %c0_9 = arith.constant 0 : index
    %c0_10 = arith.constant 0 : index
    %10 = vector.load %arg5[%c0_9, %c0_10] : memref<1x5xf32, #tpu.memory_space<vmem>>, vector<1x5xf32>
    %11 = vector.broadcast %10 : vector<1x5xf32> to vector<3x5xf32>
    %12 = arith.addf %9, %11 : vector<3x5xf32>
    %cst_11 = arith.constant 0.000000e+00 : f32
    %13 = vector.broadcast %cst_11 : f32 to vector<3x5xf32>
    %14 = arith.maximumf %12, %13 : vector<3x5xf32>
    %c0_12 = arith.constant 0 : index
    %c0_13 = arith.constant 0 : index
    %15 = vector.load %arg6[%c0_12, %c0_13] : memref<3x5xf32, #tpu.memory_space<vmem>>, vector<3x5xf32>
    tpu.vector_store %arg6[%c0_12, %c0_13], %14 {strides = array<i32>} : memref<3x5xf32, #tpu.memory_space<vmem>>, vector<3x5xf32>,
    return
  }
  func.func @transform_0(%arg0: i32) -> (i32, i32) {
    %c0_i32 = arith.constant 0 : i32
    %c0_i32_0 = arith.constant 0 : i32
    return %arg0, %c0_i32 : i32, i32
  }
  func.func @transform_1(%arg0: i32) -> (i32, i32) {
    %c0_i32 = arith.constant 0 : i32
    %c0_i32_0 = arith.constant 0 : i32
    %c0_i32_1 = arith.constant 0 : i32
    return %c0_i32, %c0_i32_0 : i32, i32
  }
  func.func @transform_2(%arg0: i32) -> (i32, i32) {
    %c0_i32 = arith.constant 0 : i32
    %c0_i32_0 = arith.constant 0 : i32
    %c0_i32_1 = arith.constant 0 : i32
    return %c0_i32, %c0_i32_0 : i32, i32
  }
  func.func @transform_3(%arg0: i32) -> (i32, i32) {
    %c0_i32 = arith.constant 0 : i32
    %c0_i32_0 = arith.constant 0 : i32
    %c0_i32_1 = arith.constant 0 : i32
    return %c0_i32, %c0_i32_0 : i32, i32
  }
  func.func @transform_4(%arg0: i32) -> (i32, i32) {
    %c0_i32 = arith.constant 0 : i32
    %c0_i32_0 = arith.constant 0 : i32
    %c0_i32_1 = arith.constant 0 : i32
    return %c0_i32, %c0_i32_0 : i32, i32
  }
  func.func @transform_5(%arg0: i32) -> (i32, i32) {
    %c0_i32 = arith.constant 0 : i32
    %c0_i32_0 = arith.constant 0 : i32
    return %arg0, %c0_i32 : i32, i32
  }
}

</mosaic_0001>

<llo_original>
// kernel: mlp2_forward.1
$region0: #{mlp2_forward.1}
  #allocation0 [shape = 'u32[]', space=smem, size = 0x4, offset = 0x4, fixed_abs, tag = 'smem constant byte address 0x4 - core index']
  #allocation1 [shape = 'u32[144,128]{1,0:T(1,128)}', space=vmem, size = 0x12000, scoped, tag = 'internal scratch']
  %s0 = inlined_call_operand.hbm [shape: f32[3,5], index: 0, kind: input, shape index: {}]
  %s1 = inlined_call_operand.hbm [shape: f32[5,5], index: 1, kind: input, shape index: {}]
  %s2 = inlined_call_operand.vmem [shape: f32[1,5], index: 2, kind: input, shape index: {}]
  %s3 = inlined_call_operand.vmem [shape: f32[5,5], index: 3, kind: input, shape index: {}]
  %s4 = inlined_call_operand.vmem [shape: f32[1,5], index: 4, kind: input, shape index: {}]
  %s5 = inlined_call_operand.hbm [shape: f32[3,5], index: 5, kind: output, shape index: {}]
  %s6 = sld [smem:[#allocation0]]
  $region38: #{mlp2_forward.1} parent=0
    _
  %s8 = ssub.s32 1, %s6
  %s9 = scalar_select 0, %s8, %s6
  $region1: #{mlp2_forward.1} parent=0
    #allocation2 [shape = 'u8[2048]{0}', space=vmem, size = 0x800, scoped, tag = 'input window, operand 0, single buffered']
    #allocation3 [shape = 's32[1]{0}', space=sflag, size = 0x4, scoped, tag = 'scoped memory for mlp2_forward.1']
    #allocation4 [shape = 's32[1]{0}', space=sflag, size = 0x4, scoped, tag = 'scoped memory for mlp2_forward.1']
    #allocation5 [shape = 'u8[4096]{0}', space=vmem, size = 0x1000, scoped, tag = 'input window, operand 1, single buffered']
    #allocation6 [shape = 's32[1]{0}', space=sflag, size = 0x4, scoped, tag = 'scoped memory for mlp2_forward.1']
    #allocation7 [shape = 'u8[2048]{0}', space=vmem, size = 0x800, scoped, tag = 'output window, operand 0, single buffered']
    %10 = vsyncpa [#allocation3], 0
    %11 = vsyncpa [#allocation6], 0
    %12 = vsyncpa [#allocation4], 0
    // Predicated region
    $region2: #{mlp2_forward.1} parent=1 // pred_check
      _
    $region3: #{mlp2_forward.1} parent=1 // pred_check_branch
      %14 = sbr.rel (0) target = $region5
    $region4: #{mlp2_forward.1} parent=1 // pred_region
      %s16 = ssub.s32 64, 64
      %17 = vsyncadd [#allocation3], %s16
      %s19 = sshll.u32 [#allocation2], 4
      %s20 = int_to_ptr.vmem [resolvable:$true] %s19
      %22 = dma.hbm_to_vmem [thread:$0]  %s0, 64, %s20, [#allocation3]
    $region5: #{mlp2_forward.1} parent=1 // pred_fallthru
      _
    // Predicated region
    $region6: #{mlp2_forward.1} parent=1 // pred_check
      _
    $region7: #{mlp2_forward.1} parent=1 // pred_check_branch
      %24 = sbr.rel (0) target = $region9
    $region8: #{mlp2_forward.1} parent=1 // pred_region
      %s26 = ssub.s32 128, 128
      %27 = vsyncadd [#allocation6], %s26
      %s29 = sshll.u32 [#allocation5], 4
      %s30 = int_to_ptr.vmem [resolvable:$true] %s29
      %32 = dma.hbm_to_vmem [thread:$0]  %s1, 128, %s30, [#allocation6]
    $region9: #{mlp2_forward.1} parent=1 // pred_fallthru
      _
    // Predicated region
    $region10: #{mlp2_forward.1} parent=1 // pred_check
      _
    $region11: #{mlp2_forward.1} parent=1 // pred_check_branch
      %34 = sbr.rel (0) target = $region13
    $region12: #{mlp2_forward.1} parent=1 // pred_region
      _
    $region13: #{mlp2_forward.1} parent=1 // pred_fallthru
      _
    // Predicated region
    $region14: #{mlp2_forward.1} parent=1 // pred_check
      _
    $region15: #{mlp2_forward.1} parent=1 // pred_check_branch
      %36 = sbr.rel (0) target = $region17
    $region16: #{mlp2_forward.1} parent=1 // pred_region
      _
    $region17: #{mlp2_forward.1} parent=1 // pred_fallthru
      _
    // Predicated region
    $region18: #{mlp2_forward.1} parent=1 // pred_check
      _
    $region19: #{mlp2_forward.1} parent=1 // pred_check_branch
      %38 = sbr.rel (0) target = $region21
    $region20: #{mlp2_forward.1} parent=1 // pred_region
      _
    $region21: #{mlp2_forward.1} parent=1 // pred_fallthru
      _
    // Predicated region
    $region22: #{mlp2_forward.1} parent=1 // pred_check
      _
    $region23: #{mlp2_forward.1} parent=1 // pred_check_branch
      %40 = sbr.rel (0) target = $region25
    $region24: #{mlp2_forward.1} parent=1 // pred_region
      %41 = dma.done [#allocation3], 64
    $region25: #{mlp2_forward.1} parent=1 // pred_fallthru
      _
    // Predicated region
    $region26: #{mlp2_forward.1} parent=1 // pred_check
      _
    $region27: #{mlp2_forward.1} parent=1 // pred_check_branch
      %43 = sbr.rel (0) target = $region29
    $region28: #{mlp2_forward.1} parent=1 // pred_region
      %44 = dma.done [#allocation6], 128
    $region29: #{mlp2_forward.1} parent=1 // pred_fallthru
      _
    %v45 = vld [vmem:[#allocation2] sm:$0x7]
    %v46 = vld [vmem:[#allocation5] sm:$0x1f]
    %v47 = vld [vmem:[%s2] sm:$0x1]
    %v49 = vlaneseq
    %v50 = vshrl.u32 %v49, 7
    %v51 = vsub.s32 0, %v50
    %v52 = vrot.slane %v47, %v51
    %vm54 = vcmask 39936
    %v56 = vsel %vm54, %v45, 0
    %vm58 = vcmask 1044480
    %v60 = vsel %vm58, %v46, 0
    %62 = vmatprep.subr.mxu0 0.0
    %63 = vmatpush1.msra.mxu0 %v60
    %64 = vmatprep.subr.mxu0 0.0
    %65 = vmatpush1.msra.mxu0 0.0
    %66 = vmatprep.subr.mxu0 0.0
    %67 = vmatpush1.msra.mxu0 0.0
    %68 = vmatprep.subr.mxu0 0.0
    %69 = vmatpush1.msra.mxu0 0.0
    %70 = vmatprep.subr.mxu0 0.0
    %71 = vmatpush1.msra.mxu0 0.0
    %72 = vmatprep.subr.mxu0 0.0
    %73 = vmatpush1.msra.mxu0 0.0
    %74 = vmatprep.subr.mxu0 0.0
    %75 = vmatpush1.msra.mxu0 0.0
    %76 = vmatprep.subr.mxu0 0.0
    %77 = vmatpush1.msra.mxu0 0.0
    %78 = vmatprep.subr.mxu0 0.0
    %79 = vmatpush1.msra.mxu0 0.0
    %80 = vmatprep.subr.mxu0 0.0
    %81 = vmatpush1.msra.mxu0 0.0
    %82 = vmatprep.subr.mxu0 0.0
    %83 = vmatpush1.msra.mxu0 0.0
    %84 = vmatprep.subr.mxu0 0.0
    %85 = vmatpush1.msra.mxu0 0.0
    %86 = vmatprep.subr.mxu0 0.0
    %87 = vmatpush1.msra.mxu0 0.0
    %88 = vmatprep.subr.mxu0 0.0
    %89 = vmatpush1.msra.mxu0 0.0
    %90 = vmatprep.subr.mxu0 0.0
    %91 = vmatpush1.msra.mxu0 0.0
    %92 = vmatprep.subr.mxu0 0.0
    %93 = vmatpush1.msra.mxu0 0.0
    %94 = vmatprep.subr.mxu0 0.0
    %95 = vmatpush1.msra.mxu0 0.0
    %96 = vmatprep.subr.mxu0 0.0
    %97 = vmatpush1.msra.mxu0 0.0
    %98 = vmatprep.subr.mxu0 0.0
    %99 = vmatpush1.msra.mxu0 0.0
    %100 = vmatprep.subr.mxu0 0.0
    %101 = vmatpush1.msra.mxu0 0.0
    %102 = vmatprep.subr.mxu0 0.0
    %103 = vmatpush1.msra.mxu0 0.0
    %104 = vmatprep.subr.mxu0 0.0
    %105 = vmatpush1.msra.mxu0 0.0
    %106 = vmatprep.subr.mxu0 0.0
    %107 = vmatpush1.msra.mxu0 0.0
    %108 = vmatprep.subr.mxu0 0.0
    %109 = vmatpush1.msra.mxu0 0.0
    %110 = vmatprep.subr.mxu0 0.0
    %111 = vmatpush1.msra.mxu0 0.0
    %112 = vmatprep.subr.mxu0 0.0
    %113 = vmatpush1.msra.mxu0 0.0
    %114 = vmatprep.subr.mxu0 0.0
    %115 = vmatpush1.msra.mxu0 0.0
    %116 = vmatprep.subr.mxu0 0.0
    %117 = vmatpush1.msra.mxu0 0.0
    %118 = vmatprep.subr.mxu0 0.0
    %119 = vmatpush1.msra.mxu0 0.0
    %120 = vmatprep.subr.mxu0 0.0
    %121 = vmatpush1.msra.mxu0 0.0
    %122 = vmatprep.subr.mxu0 0.0
    %123 = vmatpush1.msra.mxu0 0.0
    %124 = vmatprep.subr.mxu0 0.0
    %125 = vmatpush1.msra.mxu0 0.0
    %126 = vmatprep.mubr.f32.mxu0 0.0
    %127 = vmatmul.mubr.f32.gmra.mrb[0].mxu0 %v56
    %v128 = vpop.f32.mrb[0].mxu0
    %v129 = vadd.f32 %v52, %v128
    %v130 = vpop.f32.mrb[0].mxu0
    %131 = vdwg.mxu0
    %v132 = vmax.f32 %v129, 0.0
    %v133 = vld [vmem:[%s3] sm:$0x1f]
    %v134 = vld [vmem:[%s4] sm:$0x1]
    %v136 = vlaneseq
    %v137 = vshrl.u32 %v136, 7
    %v138 = vsub.s32 0, %v137
    %v139 = vrot.slane %v134, %v138
    %v142 = vsel %vm54, %v132, 0
    %v145 = vsel %vm58, %v133, 0
    %147 = vmatprep.subr.mxu0 0.0
    %148 = vmatpush1.msra.mxu0 %v145
    %149 = vmatprep.subr.mxu0 0.0
    %150 = vmatpush1.msra.mxu0 0.0
    %151 = vmatprep.subr.mxu0 0.0
    %152 = vmatpush1.msra.mxu0 0.0
    %153 = vmatprep.subr.mxu0 0.0
    %154 = vmatpush1.msra.mxu0 0.0
    %155 = vmatprep.subr.mxu0 0.0
    %156 = vmatpush1.msra.mxu0 0.0
    %157 = vmatprep.subr.mxu0 0.0
    %158 = vmatpush1.msra.mxu0 0.0
    %159 = vmatprep.subr.mxu0 0.0
    %160 = vmatpush1.msra.mxu0 0.0
    %161 = vmatprep.subr.mxu0 0.0
    %162 = vmatpush1.msra.mxu0 0.0
    %163 = vmatprep.subr.mxu0 0.0
    %164 = vmatpush1.msra.mxu0 0.0
    %165 = vmatprep.subr.mxu0 0.0
    %166 = vmatpush1.msra.mxu0 0.0
    %167 = vmatprep.subr.mxu0 0.0
    %168 = vmatpush1.msra.mxu0 0.0
    %169 = vmatprep.subr.mxu0 0.0
    %170 = vmatpush1.msra.mxu0 0.0
    %171 = vmatprep.subr.mxu0 0.0
    %172 = vmatpush1.msra.mxu0 0.0
    %173 = vmatprep.subr.mxu0 0.0
    %174 = vmatpush1.msra.mxu0 0.0
    %175 = vmatprep.subr.mxu0 0.0
    %176 = vmatpush1.msra.mxu0 0.0
    %177 = vmatprep.subr.mxu0 0.0
    %178 = vmatpush1.msra.mxu0 0.0
    %179 = vmatprep.subr.mxu0 0.0
    %180 = vmatpush1.msra.mxu0 0.0
    %181 = vmatprep.subr.mxu0 0.0
    %182 = vmatpush1.msra.mxu0 0.0
    %183 = vmatprep.subr.mxu0 0.0
    %184 = vmatpush1.msra.mxu0 0.0
    %185 = vmatprep.subr.mxu0 0.0
    %186 = vmatpush1.msra.mxu0 0.0
    %187 = vmatprep.subr.mxu0 0.0
    %188 = vmatpush1.msra.mxu0 0.0
    %189 = vmatprep.subr.mxu0 0.0
    %190 = vmatpush1.msra.mxu0 0.0
    %191 = vmatprep.subr.mxu0 0.0
    %192 = vmatpush1.msra.mxu0 0.0
    %193 = vmatprep.subr.mxu0 0.0
    %194 = vmatpush1.msra.mxu0 0.0
    %195 = vmatprep.subr.mxu0 0.0
    %196 = vmatpush1.msra.mxu0 0.0
    %197 = vmatprep.subr.mxu0 0.0
    %198 = vmatpush1.msra.mxu0 0.0
    %199 = vmatprep.subr.mxu0 0.0
    %200 = vmatpush1.msra.mxu0 0.0
    %201 = vmatprep.subr.mxu0 0.0
    %202 = vmatpush1.msra.mxu0 0.0
    %203 = vmatprep.subr.mxu0 0.0
    %204 = vmatpush1.msra.mxu0 0.0
    %205 = vmatprep.subr.mxu0 0.0
    %206 = vmatpush1.msra.mxu0 0.0
    %207 = vmatprep.subr.mxu0 0.0
    %208 = vmatpush1.msra.mxu0 0.0
    %209 = vmatprep.subr.mxu0 0.0
    %210 = vmatpush1.msra.mxu0 0.0
    %211 = vmatprep.mubr.f32.mxu0 0.0
    %212 = vmatmul.mubr.f32.gmra.mrb[0].mxu0 %v142
    %v213 = vpop.f32.mrb[0].mxu0
    %v214 = vadd.f32 %v139, %v213
    %v215 = vpop.f32.mrb[0].mxu0
    %216 = vdwg.mxu0
    %v217 = vmax.f32 %v214, 0.0
    %vm218 = vcmask 34816
    %219 = vst.msk [vmem:[#allocation7] sm:$0x7] %vm218, %v217
    // Predicated region
    $region30: #{mlp2_forward.1} parent=1 // pred_check
      _
    $region31: #{mlp2_forward.1} parent=1 // pred_check_branch
      %221 = sbr.rel (0) target = $region33
    $region32: #{mlp2_forward.1} parent=1 // pred_region
      %s223 = ssub.s32 64, 64
      %224 = vsyncadd [#allocation4], %s223
      %s226 = sshll.u32 [#allocation7], 4
      %s227 = int_to_ptr.vmem [resolvable:$true] %s226
      %229 = dma.vmem_to_hbm [thread:$0]  %s227, 64, %s5, [#allocation4]
    $region33: #{mlp2_forward.1} parent=1 // pred_fallthru
      _
    // Predicated region
    $region34: #{mlp2_forward.1} parent=1 // pred_check
      _
    $region35: #{mlp2_forward.1} parent=1 // pred_check_branch
      %231 = sbr.rel (0) target = $region37
    $region36: #{mlp2_forward.1} parent=1 // pred_region
      %232 = dma.done [#allocation4], 64
    $region37: #{mlp2_forward.1} parent=1 // pred_fallthru
      _
    %233 = vsyncpa [#allocation3], 1
    %234 = vsyncpa [#allocation6], 1
    %235 = vsyncpa [#allocation4], 1

</llo_original>
